<compile_context>
chip_gen: v6e
topology: v6e:2x2x1
jax: 0.10.0
libtpu: 0.0.40
codegen_flags: <defaults>
</compile_context>

<pallas_src>
import functools

import jax
import jax.numpy as jnp
from jax.experimental import pallas as pl
from jax.experimental.pallas import tpu as pltpu


def _round_up(x, m):
    return ((x + m - 1) // m) * m


def autoencoder_kernel(x_ref, w1_ref, b1_ref, w2_ref, b2_ref, out_ref):
    # Encoder: Linear(D -> H) + ReLU.  MXU matmul, f32 accumulation.
    h = jnp.dot(x_ref[...], w1_ref[...], preferred_element_type=jnp.float32)
    h = jnp.maximum(h + b1_ref[...], 0.0)              # (TB, H) + (1, H), f32 epilogue

    # Decoder: Linear(H -> D) + Sigmoid.  Keep (TB, H) row-major, no reshape.
    y = jnp.dot(h.astype(w2_ref.dtype), w2_ref[...],
                preferred_element_type=jnp.float32)
    y = jax.nn.sigmoid(y + b2_ref[...])                # (TB, D) + (1, D), f32 epilogue
    out_ref[...] = y.astype(out_ref.dtype)


def autoencoder_forward(x, w1, b1, w2, b2, *, compute_dtype=None, batch_tile=256):
    """x: (B, D); w1: (D, H); b1: (1, H) or (H,); w2: (H, D); b2: (1, D) or (D,).

    Weights are stored pre-transposed as (in, out), so y = x @ W + b matches
    PyTorch's x @ weight.T + bias.
    """
    B, D = x.shape
    Dw, H = w1.shape
    assert Dw == D and w2.shape == (H, D)
    out_dtype = x.dtype

    if compute_dtype is None:
        compute_dtype = x.dtype

    # MXU inputs in compute_dtype (bf16 halves weight/x DMA on v6e/v7x).
    # Biases stay f32 so the epilogue (bias + ReLU + sigmoid) is a pure f32
    # VPU/EUP path on every chip (no bf16 elementwise on v5e).
    x = x.astype(compute_dtype)
    w1 = w1.astype(compute_dtype)
    w2 = w2.astype(compute_dtype)
    b1 = b1.astype(jnp.float32).reshape(1, H)
    b2 = b2.astype(jnp.float32).reshape(1, D)

    # Batch tile: fill the MXU M dimension, never exceed the (padded) batch,
    # keep a multiple of 8 sublanes.
    TB = min(_round_up(batch_tile, 8), _round_up(B, 8))
    Bp = _round_up(B, TB)
    if Bp != B:
        x = jnp.pad(x, ((0, Bp - B), (0, 0)))
    grid = (Bp // TB,)

    in_bytes = jnp.dtype(compute_dtype).itemsize
    out_bytes = jnp.dtype(out_dtype).itemsize

    # VMEM budget: Pallas double-buffers every input/output block.
    vmem_bytes = 2 * (TB * D * in_bytes            # x tile
                      + D * H * in_bytes           # w1 (resident)
                      + H * D * in_bytes           # w2 (resident)
                      + H * 4 + D * 4              # biases
                      + TB * D * out_bytes)        # out tile
    vmem_bytes += 4 * TB * max(D, H) * 4           # f32 intermediates headroom
    vmem_limit = int(min(max(vmem_bytes + (4 << 20), 16 << 20), 64 << 20))

    cost = pl.CostEstimate(
        flops=2 * Bp * D * H + 2 * Bp * H * D,
        transcendentals=Bp * D,                    # sigmoid
        bytes_accessed=(Bp * D * in_bytes + D * H * in_bytes + H * D * in_bytes
                        + H * 4 + D * 4 + Bp * D * out_bytes),
    )

    out = pl.pallas_call(
        autoencoder_kernel,
        out_shape=jax.ShapeDtypeStruct((Bp, D), out_dtype),
        grid_spec=pl.GridSpec(
            grid=grid,
            in_specs=[
                pl.BlockSpec((TB, D), lambda i: (i, 0)),   # x: tiled over batch
                pl.BlockSpec((D, H), lambda i: (0, 0)),    # w1: VMEM-resident
                pl.BlockSpec((1, H), lambda i: (0, 0)),    # b1: VMEM-resident
                pl.BlockSpec((H, D), lambda i: (0, 0)),    # w2: VMEM-resident
                pl.BlockSpec((1, D), lambda i: (0, 0)),    # b2: VMEM-resident
            ],
            out_specs=pl.BlockSpec((TB, D), lambda i: (i, 0)),
        ),
        compiler_params=pltpu.CompilerParams(
            dimension_semantics=("parallel",),     # megacore split on v7x
            vmem_limit_bytes=vmem_limit,
        ),
        cost_estimate=cost,
    )(x, w1, b1, w2, b2)

    return out[:B] if Bp != B else out


def init_params(key, input_size, hidden_size, dtype=jnp.float32):
    """PyTorch-style uniform(-1/sqrt(fan_in), 1/sqrt(fan_in)) init.

    Weights are returned already transposed to (in, out) for the kernel.
    """
    k1, k2, k3, k4 = jax.random.split(key, 4)
    bound1 = 1.0 / jnp.sqrt(input_size)
    bound2 = 1.0 / jnp.sqrt(hidden_size)
    w1 = jax.random.uniform(k1, (input_size, hidden_size), dtype, -bound1, bound1)
    b1 = jax.random.uniform(k2, (1, hidden_size), dtype, -bound1, bound1)
    w2 = jax.random.uniform(k3, (hidden_size, input_size), dtype, -bound2, bound2)
    b2 = jax.random.uniform(k4, (1, input_size), dtype, -bound2, bound2)
    return w1, b1, w2, b2


def _reference(x, w1, b1, w2, b2):
    h = jnp.maximum(x @ w1 + b1, 0.0)
    return jax.nn.sigmoid(h @ w2 + b2)


if __name__ == "__main__":
    # Small shapes consistent with the module: flat feature vectors.
    batch = 32
    input_size = 256
    hidden_size = 128

    key = jax.random.PRNGKey(0)
    kx, kp = jax.random.split(key)
    x = jax.random.uniform(kx, (batch, input_size), jnp.float32)
    w1, b1, w2, b2 = init_params(kp, input_size, hidden_size)

    # 1) f32 MXU path — exact match against pure-JAX reference.
    out = jax.block_until_ready(
        autoencoder_forward(x, w1, b1, w2, b2, compute_dtype=jnp.float32))
    assert out.shape == (batch, input_size)
    assert jnp.allclose(out, _reference(x, w1, b1, w2, b2), atol=1e-5, rtol=1e-5)

    # 2) Ragged batch — exercises batch padding + tiling path.
    xr = x[:13]
    out_r = jax.block_until_ready(
        autoencoder_forward(xr, w1, b1, w2, b2, compute_dtype=jnp.float32))
    assert out_r.shape == (13, input_size)
    assert jnp.allclose(out_r, _reference(xr, w1, b1, w2, b2), atol=1e-5, rtol=1e-5)

    # 3) bf16 MXU fast path (v6e/v7x) — f32 accumulation, looser tolerance.
    out_bf = jax.block_until_ready(
        autoencoder_forward(x, w1, b1, w2, b2, compute_dtype=jnp.bfloat16))
    assert out_bf.shape == (batch, input_size)
    assert jnp.allclose(out_bf, _reference(x, w1, b1, w2, b2), atol=3e-2, rtol=3e-2)

    print("KERNEL_OK")
</pallas_src>

<mosaic_0001>
module attributes {stable_mosaic.version = 11 : i64} {
  func.func @autoencoder_kernel(%arg0: i32, %arg1: memref<32x256xf32, #tpu.memory_space<vmem>>, %arg2: memref<256x128xf32, #tpu.memory_space<vmem>>, %arg3: memref<1x128xf32, #tpu.memory_space<vmem>>, %arg4: memref<128x256xf32, #tpu.memory_space<vmem>>, %arg5: memref<1x256xf32, #tpu.memory_space<vmem>>, %arg6: memref<32x256xf32, #tpu.memory_space<vmem>>) attributes {dimension_semantics = [#tpu.dimension_semantics<parallel>], iteration_bounds = array<i64: 1>, scalar_prefetch = 0 : i64, scratch_operands = 0 : i64, tpu.core_type = #tpu.core_type<tc>, window_params = [{transform_indices = @transform_0, window_bounds = array<i64: 32, 256>}, {pipeline_mode = #tpu.pipeline_mode<synchronous>, transform_indices = @transform_1, window_bounds = array<i64: 256, 128>}, {pipeline_mode = #tpu.pipeline_mode<synchronous>, transform_indices = @transform_2, window_bounds = array<i64: 1, 128>}, {pipeline_mode = #tpu.pipeline_mode<synchronous>, transform_indices = @transform_3, window_bounds = array<i64: 128, 256>}, {pipeline_mode = #tpu.pipeline_mode<synchronous>, transform_indices = @transform_4, window_bounds = array<i64: 1, 256>}, {transform_indices = @transform_5, window_bounds = array<i64: 32, 256>}]} {
    %c0 = arith.constant 0 : index
    %c0_0 = arith.constant 0 : index
    %0 = vector.load %arg1[%c0, %c0_0] : memref<32x256xf32, #tpu.memory_space<vmem>>, vector<32x256xf32>
    %c0_1 = arith.constant 0 : index
    %c0_2 = arith.constant 0 : index
    %1 = vector.load %arg2[%c0_1, %c0_2] : memref<256x128xf32, #tpu.memory_space<vmem>>, vector<256x128xf32>
    %cst = arith.constant dense<0.000000e+00> : vector<32x128xf32>
    %2 = tpu.matmul %0, %1, %cst {dimension_numbers = #tpu.dot_dimension_numbers<[1], [0], [0], [1], [0, 0, 1, 1], [], []>} : vector<32x256xf32>, vector<256x128xf32>, vector<32x128xf32> -> vector<32x128xf32>
    %c0_3 = arith.constant 0 : index
    %c0_4 = arith.constant 0 : index
    %3 = vector.load %arg3[%c0_3, %c0_4] : memref<1x128xf32, #tpu.memory_space<vmem>>, vector<1x128xf32>
    %4 = vector.broadcast %3 : vector<1x128xf32> to vector<32x128xf32>
    %5 = arith.addf %2, %4 : vector<32x128xf32>
    %cst_5 = arith.constant 0.000000e+00 : f32
    %6 = vector.broadcast %cst_5 : f32 to vector<32x128xf32>
    %7 = arith.maximumf %5, %6 : vector<32x128xf32>
    %c0_6 = arith.constant 0 : index
    %c0_7 = arith.constant 0 : index
    %8 = vector.load %arg4[%c0_6, %c0_7] : memref<128x256xf32, #tpu.memory_space<vmem>>, vector<128x256xf32>
    %cst_8 = arith.constant dense<0.000000e+00> : vector<32x256xf32>
    %9 = tpu.matmul %7, %8, %cst_8 {dimension_numbers = #tpu.dot_dimension_numbers<[1], [0], [0], [1], [0, 0, 1, 1], [], []>} : vector<32x128xf32>, vector<128x256xf32>, vector<32x256xf32> -> vector<32x256xf32>
    %c0_9 = arith.constant 0 : index
    %c0_10 = arith.constant 0 : index
    %10 = vector.load %arg5[%c0_9, %c0_10] : memref<1x256xf32, #tpu.memory_space<vmem>>, vector<1x256xf32>
    %11 = vector.broadcast %10 : vector<1x256xf32> to vector<32x256xf32>
    %12 = arith.addf %9, %11 : vector<32x256xf32>
    %13 = arith.negf %12 : vector<32x256xf32>
    %14 = math.exp %13 : vector<32x256xf32>
    %cst_11 = arith.constant 1.000000e+00 : f32
    %15 = vector.broadcast %cst_11 : f32 to vector<32x256xf32>
    %16 = arith.addf %15, %14 : vector<32x256xf32>
    %17 = arith.divf %15, %16 : vector<32x256xf32>
    %c0_12 = arith.constant 0 : index
    %c0_13 = arith.constant 0 : index
    %18 = vector.load %arg6[%c0_12, %c0_13] : memref<32x256xf32, #tpu.memory_space<vmem>>, vector<32x256xf32>
    tpu.vector_store %arg6[%c0_12, %c0_13], %17 {strides = array<i32>} : memref<32x256xf32, #tpu.memory_space<vmem>>, vector<32x256xf32>,
    return
  }
  func.func @transform_0(%arg0: i32) -> (i32, i32) {
    %c0_i32 = arith.constant 0 : i32
    %c0_i32_0 = arith.constant 0 : i32
    return %arg0, %c0_i32 : i32, i32
  }
  func.func @transform_1(%arg0: i32) -> (i32, i32) {
    %c0_i32 = arith.constant 0 : i32
    %c0_i32_0 = arith.constant 0 : i32
    %c0_i32_1 = arith.constant 0 : i32
    return %c0_i32, %c0_i32_0 : i32, i32
  }
  func.func @transform_2(%arg0: i32) -> (i32, i32) {
    %c0_i32 = arith.constant 0 : i32
    %c0_i32_0 = arith.constant 0 : i32
    %c0_i32_1 = arith.constant 0 : i32
    return %c0_i32, %c0_i32_0 : i32, i32
  }
  func.func @transform_3(%arg0: i32) -> (i32, i32) {
    %c0_i32 = arith.constant 0 : i32
    %c0_i32_0 = arith.constant 0 : i32
    %c0_i32_1 = arith.constant 0 : i32
    return %c0_i32, %c0_i32_0 : i32, i32
  }
  func.func @transform_4(%arg0: i32) -> (i32, i32) {
    %c0_i32 = arith.constant 0 : i32
    %c0_i32_0 = arith.constant 0 : i32
    %c0_i32_1 = arith.constant 0 : i32
    return %c0_i32, %c0_i32_0 : i32, i32
  }
  func.func @transform_5(%arg0: i32) -> (i32, i32) {
    %c0_i32 = arith.constant 0 : i32
    %c0_i32_0 = arith.constant 0 : i32
    return %arg0, %c0_i32 : i32, i32
  }
}

</mosaic_0001>

<llo_original>
// kernel: tpu_custom_call.1
$region0: #{tpu_custom_call.1}
  #allocation0 [shape = 'u32[]', space=smem, size = 0x4, offset = 0x4, fixed_abs, tag = 'smem constant byte address 0x4 - core index']
  #allocation1 [shape = 'u32[144,128]{1,0:T(1,128)}', space=vmem, size = 0x12000, scoped, tag = 'internal scratch']
  %s0 = inlined_call_operand.hbm [shape: f32[32,256], index: 0, kind: input, shape index: {}]
  %s1 = inlined_call_operand.hbm [shape: f32[256,128], index: 1, kind: input, shape index: {}]
  %s2 = inlined_call_operand.vmem [shape: f32[1,128], index: 2, kind: input, shape index: {}]
  %s3 = inlined_call_operand.hbm [shape: f32[128,256], index: 3, kind: input, shape index: {}]
  %s4 = inlined_call_operand.vmem [shape: f32[1,256], index: 4, kind: input, shape index: {}]
  %s5 = inlined_call_operand.hbm [shape: f32[32,256], index: 5, kind: output, shape index: {}]
  %s6 = sld [smem:[#allocation0]]
  $region42: #{tpu_custom_call.1} parent=0
    _
  %s8 = ssub.s32 1, %s6
  %s9 = scalar_select 0, %s8, %s6
  $region1: #{tpu_custom_call.1} parent=0
    #allocation2 [shape = 'u8[32768]{0}', space=vmem, size = 0x8000, scoped, tag = 'input window, operand 0, single buffered']
    #allocation3 [shape = 's32[1]{0}', space=sflag, size = 0x4, scoped, tag = 'scoped memory for tpu_custom_call.1']
    #allocation4 [shape = 's32[1]{0}', space=sflag, size = 0x4, scoped, tag = 'scoped memory for tpu_custom_call.1']
    #allocation5 [shape = 'u8[131072]{0}', space=vmem, size = 0x20000, scoped, tag = 'input window, operand 1, single buffered']
    #allocation6 [shape = 's32[1]{0}', space=sflag, size = 0x4, scoped, tag = 'scoped memory for tpu_custom_call.1']
    #allocation7 [shape = 'u8[131072]{0}', space=vmem, size = 0x20000, scoped, tag = 'input window, operand 3, single buffered']
    #allocation8 [shape = 'u8[32768]{0}', space=vmem, size = 0x8000, scoped, tag = 'output window, operand 0, single buffered']
    %10 = vsyncpa [#allocation3], 0
    %11 = vsyncpa [#allocation6], 0
    %12 = vsyncpa [#allocation4], 0
    // Predicated region
    $region2: #{tpu_custom_call.1} parent=1 // pred_check
      _
    $region3: #{tpu_custom_call.1} parent=1 // pred_check_branch
      %14 = sbr.rel (0) target = $region5
    $region4: #{tpu_custom_call.1} parent=1 // pred_region
      %s16 = ssub.s32 1024, 1024
      %17 = vsyncadd [#allocation3], %s16
      %s18 = sshll.u32 [#allocation2], 4
      %s19 = int_to_ptr.vmem [resolvable:$true] %s18
      %24 = dma.hbm_to_vmem [thread:$0]  %s0, 1024, %s19, [#allocation3], 256, 256, 16
    $region5: #{tpu_custom_call.1} parent=1 // pred_fallthru
      _
    // Predicated region
    $region6: #{tpu_custom_call.1} parent=1 // pred_check
      _
    $region7: #{tpu_custom_call.1} parent=1 // pred_check_branch
      %26 = sbr.rel (0) target = $region9
    $region8: #{tpu_custom_call.1} parent=1 // pred_region
      %s28 = ssub.s32 4096, 4096
      %29 = vsyncadd [#allocation6], %s28
      %s30 = sshll.u32 [#allocation5], 4
      %s31 = int_to_ptr.vmem [resolvable:$true] %s30
      %36 = dma.hbm_to_vmem [thread:$0]  %s1, 4096, %s31, [#allocation6], 128, 128, 8
    $region9: #{tpu_custom_call.1} parent=1 // pred_fallthru
      _
    // Predicated region
    $region10: #{tpu_custom_call.1} parent=1 // pred_check
      _
    $region11: #{tpu_custom_call.1} parent=1 // pred_check_branch
      %38 = sbr.rel (0) target = $region13
    $region12: #{tpu_custom_call.1} parent=1 // pred_region
      _
    $region13: #{tpu_custom_call.1} parent=1 // pred_fallthru
      _
    // Predicated region
    $region14: #{tpu_custom_call.1} parent=1 // pred_check
      _
    $region15: #{tpu_custom_call.1} parent=1 // pred_check_branch
      %40 = sbr.rel (0) target = $region17
    $region16: #{tpu_custom_call.1} parent=1 // pred_region
      %s42 = ssub.s32 4096, 4096
      %43 = vsyncadd [#allocation6], %s42
      %s44 = sshll.u32 [#allocation7], 4
      %s45 = int_to_ptr.vmem [resolvable:$true] %s44
      %50 = dma.hbm_to_vmem [thread:$0]  %s3, 4096, %s45, [#allocation6], 256, 256, 16
    $region17: #{tpu_custom_call.1} parent=1 // pred_fallthru
      _
    // Predicated region
    $region18: #{tpu_custom_call.1} parent=1 // pred_check
      _
    $region19: #{tpu_custom_call.1} parent=1 // pred_check_branch
      %52 = sbr.rel (0) target = $region21
    $region20: #{tpu_custom_call.1} parent=1 // pred_region
      _
    $region21: #{tpu_custom_call.1} parent=1 // pred_fallthru
      _
    // Predicated region
    $region22: #{tpu_custom_call.1} parent=1 // pred_check
      _
    $region23: #{tpu_custom_call.1} parent=1 // pred_check_branch
      %54 = sbr.rel (0) target = $region25
    $region24: #{tpu_custom_call.1} parent=1 // pred_region
      %55 = dma.done [#allocation3], 1024
    $region25: #{tpu_custom_call.1} parent=1 // pred_fallthru
      _
    // Predicated region
    $region26: #{tpu_custom_call.1} parent=1 // pred_check
      _
    $region27: #{tpu_custom_call.1} parent=1 // pred_check_branch
      %57 = sbr.rel (0) target = $region29
    $region28: #{tpu_custom_call.1} parent=1 // pred_region
      %58 = dma.done [#allocation6], 4096
    $region29: #{tpu_custom_call.1} parent=1 // pred_fallthru
      _
    // Predicated region
    $region30: #{tpu_custom_call.1} parent=1 // pred_check
      _
    $region31: #{tpu_custom_call.1} parent=1 // pred_check_branch
      %60 = sbr.rel (0) target = $region33
    $region32: #{tpu_custom_call.1} parent=1 // pred_region
      %61 = dma.done [#allocation6], 4096
    $region33: #{tpu_custom_call.1} parent=1 // pred_fallthru
      _
    %v62 = vld [vmem:[#allocation2] sm:$0xff]
    %v63 = vld [vmem:[#allocation2 + $0x8] sm:$0xff]
    %v64 = vld [vmem:[#allocation2 + $0x10] sm:$0xff]
    %v65 = vld [vmem:[#allocation2 + $0x18] sm:$0xff]
    %v66 = vld [vmem:[#allocation2 + $0x20] sm:$0xff]
    %v67 = vld [vmem:[#allocation2 + $0x28] sm:$0xff]
    %v68 = vld [vmem:[#allocation2 + $0x30] sm:$0xff]
    %v69 = vld [vmem:[#allocation2 + $0x38] sm:$0xff]
    %v70 = vld [vmem:[#allocation5] sm:$0xff]
    %v71 = vld [vmem:[#allocation5 + $0x8] sm:$0xff]
    %v72 = vld [vmem:[#allocation5 + $0x10] sm:$0xff]
    %v73 = vld [vmem:[#allocation5 + $0x18] sm:$0xff]
    %v74 = vld [vmem:[#allocation5 + $0x20] sm:$0xff]
    %v75 = vld [vmem:[#allocation5 + $0x28] sm:$0xff]
    %v76 = vld [vmem:[#allocation5 + $0x30] sm:$0xff]
    %v77 = vld [vmem:[#allocation5 + $0x38] sm:$0xff]
    %v78 = vld [vmem:[#allocation5 + $0x40] sm:$0xff]
    %v79 = vld [vmem:[#allocation5 + $0x48] sm:$0xff]
    %v80 = vld [vmem:[#allocation5 + $0x50] sm:$0xff]
    %v81 = vld [vmem:[#allocation5 + $0x58] sm:$0xff]
    %v82 = vld [vmem:[#allocation5 + $0x60] sm:$0xff]
    %v83 = vld [vmem:[#allocation5 + $0x68] sm:$0xff]
    %v84 = vld [vmem:[#allocation5 + $0x70] sm:$0xff]
    %v85 = vld [vmem:[#allocation5 + $0x78] sm:$0xff]
    %v86 = vld [vmem:[#allocation5 + $0x80] sm:$0xff]
    %v87 = vld [vmem:[#allocation5 + $0x88] sm:$0xff]
    %v88 = vld [vmem:[#allocation5 + $0x90] sm:$0xff]
    %v89 = vld [vmem:[#allocation5 + $0x98] sm:$0xff]
    %v90 = vld [vmem:[#allocation5 + $0xa0] sm:$0xff]
    %v91 = vld [vmem:[#allocation5 + $0xa8] sm:$0xff]
    %v92 = vld [vmem:[#allocation5 + $0xb0] sm:$0xff]
    %v93 = vld [vmem:[#allocation5 + $0xb8] sm:$0xff]
    %v94 = vld [vmem:[#allocation5 + $0xc0] sm:$0xff]
    %v95 = vld [vmem:[#allocation5 + $0xc8] sm:$0xff]
    %v96 = vld [vmem:[#allocation5 + $0xd0] sm:$0xff]
    %v97 = vld [vmem:[#allocation5 + $0xd8] sm:$0xff]
    %v98 = vld [vmem:[#allocation5 + $0xe0] sm:$0xff]
    %v99 = vld [vmem:[#allocation5 + $0xe8] sm:$0xff]
    %v100 = vld [vmem:[#allocation5 + $0xf0] sm:$0xff]
    %v101 = vld [vmem:[#allocation5 + $0xf8] sm:$0xff]
    %v102 = vld [vmem:[%s2] sm:$0x1]
    %v104 = vlaneseq
    %v105 = vshrl.u32 %v104, 7
    %v106 = vsub.s32 0, %v105
    %v107 = vrot.slane %v102, %v106
    %109 = vmatprep.subr.mxu0 0.0
    %110 = vmatpush1.msra.mxu0 %v85
    %111 = vmatprep.subr.mxu0 0.0
    %112 = vmatpush1.msra.mxu0 %v84
    %113 = vmatprep.subr.mxu0 0.0
    %114 = vmatpush1.msra.mxu0 %v83
    %115 = vmatprep.subr.mxu0 0.0
    %116 = vmatpush1.msra.mxu0 %v82
    %117 = vmatprep.subr.mxu0 0.0
    %118 = vmatpush1.msra.mxu0 %v81
    %119 = vmatprep.subr.mxu0 0.0
    %120 = vmatpush1.msra.mxu0 %v80
    %121 = vmatprep.subr.mxu0 0.0
    %122 = vmatpush1.msra.mxu0 %v79
    %123 = vmatprep.subr.mxu0 0.0
    %124 = vmatpush1.msra.mxu0 %v78
    %125 = vmatprep.subr.mxu0 0.0
    %126 = vmatpush1.msra.mxu0 %v77
    %127 = vmatprep.subr.mxu0 0.0
    %128 = vmatpush1.msra.mxu0 %v76
    %129 = vmatprep.subr.mxu0 0.0
    %130 = vmatpush1.msra.mxu0 %v75
    %131 = vmatprep.subr.mxu0 0.0
    %132 = vmatpush1.msra.mxu0 %v74
    %133 = vmatprep.subr.mxu0 0.0
    %134 = vmatpush1.msra.mxu0 %v73
    %135 = vmatprep.subr.mxu0 0.0
    %136 = vmatpush1.msra.mxu0 %v72
    %137 = vmatprep.subr.mxu0 0.0
    %138 = vmatpush1.msra.mxu0 %v71
    %139 = vmatprep.subr.mxu0 0.0
    %140 = vmatpush1.msra.mxu0 %v70
    %141 = vmatprep.subr.mxu0 0.0
    %142 = vmatpush2.msra.mxu0 %v101
    %143 = vmatprep.subr.mxu0 0.0
    %144 = vmatpush2.msra.mxu0 %v100
    %145 = vmatprep.subr.mxu0 0.0
    %146 = vmatpush2.msra.mxu0 %v99
    %147 = vmatprep.subr.mxu0 0.0
    %148 = vmatpush2.msra.mxu0 %v98
    %149 = vmatprep.subr.mxu0 0.0
    %150 = vmatpush2.msra.mxu0 %v97
    %151 = vmatprep.subr.mxu0 0.0
    %152 = vmatpush2.msra.mxu0 %v96
    %153 = vmatprep.subr.mxu0 0.0
    %154 = vmatpush2.msra.mxu0 %v95
    %155 = vmatprep.subr.mxu0 0.0
    %156 = vmatpush2.msra.mxu0 %v94
    %157 = vmatprep.subr.mxu0 0.0
    %158 = vmatpush2.msra.mxu0 %v93
    %159 = vmatprep.subr.mxu0 0.0
    %160 = vmatpush2.msra.mxu0 %v92
    %161 = vmatprep.subr.mxu0 0.0
    %162 = vmatpush2.msra.mxu0 %v91
    %163 = vmatprep.subr.mxu0 0.0
    %164 = vmatpush2.msra.mxu0 %v90
    %165 = vmatprep.subr.mxu0 0.0
    %166 = vmatpush2.msra.mxu0 %v89
    %167 = vmatprep.subr.mxu0 0.0
    %168 = vmatpush2.msra.mxu0 %v88
    %169 = vmatprep.subr.mxu0 0.0
    %170 = vmatpush2.msra.mxu0 %v87
    %171 = vmatprep.subr.mxu0 0.0
    %172 = vmatpush2.msra.mxu0 %v86
    %173 = vmatprep.mubr.f32.mxu0 %v63
    %174 = vmatmul.mubr.f32.gmra.mxu0 %v62
    %v175 = vpop.f32.mrf.mxu0
    %v176 = vadd.f32 %v107, %v175
    %v177 = vpop.f32.mrf.mxu0
    %178 = vmatprep.mubr.f32.mxu0 %v65
    %179 = vmatmul.mubr.f32.gmra.mxu0 %v64
    %v180 = vpop.f32.mrf.mxu0
    %v181 = vadd.f32 %v107, %v180
    %v182 = vpop.f32.mrf.mxu0
    %183 = vmatprep.mubr.f32.mxu0 %v67
    %184 = vmatmul.mubr.f32.gmra.mxu0 %v66
    %v185 = vpop.f32.mrf.mxu0
    %v186 = vadd.f32 %v107, %v185
    %v187 = vpop.f32.mrf.mxu0
    %188 = vmatprep.mubr.f32.mxu0 %v69
    %189 = vmatmul.mubr.f32.gmra.mxu0 %v68
    %v190 = vpop.f32.mrf.mxu0
    %v191 = vadd.f32 %v107, %v190
    %v192 = vpop.f32.mrf.mxu0
    %193 = vdwg.mxu0
    %v194 = vmax.f32 %v176, 0.0
    %v195 = vmax.f32 %v181, 0.0
    %v196 = vmax.f32 %v186, 0.0
    %v197 = vmax.f32 %v191, 0.0
    %v198 = vld [vmem:[#allocation7] sm:$0xff]
    %v199 = vld [vmem:[#allocation7 + $0x8] sm:$0xff]
    %v200 = vld [vmem:[#allocation7 + $0x10] sm:$0xff]
    %v201 = vld [vmem:[#allocation7 + $0x18] sm:$0xff]
    %v202 = vld [vmem:[#allocation7 + $0x20] sm:$0xff]
    %v203 = vld [vmem:[#allocation7 + $0x28] sm:$0xff]
    %v204 = vld [vmem:[#allocation7 + $0x30] sm:$0xff]
    %v205 = vld [vmem:[#allocation7 + $0x38] sm:$0xff]
    %v206 = vld [vmem:[#allocation7 + $0x40] sm:$0xff]
    %v207 = vld [vmem:[#allocation7 + $0x48] sm:$0xff]
    %v208 = vld [vmem:[#allocation7 + $0x50] sm:$0xff]
    %v209 = vld [vmem:[#allocation7 + $0x58] sm:$0xff]
    %v210 = vld [vmem:[#allocation7 + $0x60] sm:$0xff]
    %v211 = vld [vmem:[#allocation7 + $0x68] sm:$0xff]
    %v212 = vld [vmem:[#allocation7 + $0x70] sm:$0xff]
    %v213 = vld [vmem:[#allocation7 + $0x78] sm:$0xff]
    %v214 = vld [vmem:[#allocation7 + $0x80] sm:$0xff]
    %v215 = vld [vmem:[#allocation7 + $0x88] sm:$0xff]
    %v216 = vld [vmem:[#allocation7 + $0x90] sm:$0xff]
    %v217 = vld [vmem:[#allocation7 + $0x98] sm:$0xff]
    %v218 = vld [vmem:[#allocation7 + $0xa0] sm:$0xff]
    %v219 = vld [vmem:[#allocation7 + $0xa8] sm:$0xff]
    %v220 = vld [vmem:[#allocation7 + $0xb0] sm:$0xff]
    %v221 = vld [vmem:[#allocation7 + $0xb8] sm:$0xff]
    %v222 = vld [vmem:[#allocation7 + $0xc0] sm:$0xff]
    %v223 = vld [vmem:[#allocation7 + $0xc8] sm:$0xff]
    %v224 = vld [vmem:[#allocation7 + $0xd0] sm:$0xff]
    %v225 = vld [vmem:[#allocation7 + $0xd8] sm:$0xff]
    %v226 = vld [vmem:[#allocation7 + $0xe0] sm:$0xff]
    %v227 = vld [vmem:[#allocation7 + $0xe8] sm:$0xff]
    %v228 = vld [vmem:[#allocation7 + $0xf0] sm:$0xff]
    %v229 = vld [vmem:[#allocation7 + $0xf8] sm:$0xff]
    %v230 = vld [vmem:[%s4] sm:$0x3]
    %v232 = vlaneseq
    %v233 = vshrl.u32 %v232, 7
    %v234 = vsub.s32 0, %v233
    %v235 = vrot.slane %v230, %v234
    %v236 = vlaneseq
    %v237 = vshrl.u32 %v236, 7
    %v238 = vsub.s32 1, %v237
    %v239 = vrot.slane %v230, %v238
    %242 = vmatprep.subr.mxu0 %v229
    %243 = vmatpush1.msra.mxu0 %v228
    %244 = vmatprep.subr.mxu0 %v227
    %245 = vmatpush1.msra.mxu0 %v226
    %246 = vmatprep.subr.mxu0 %v225
    %247 = vmatpush1.msra.mxu0 %v224
    %248 = vmatprep.subr.mxu0 %v223
    %249 = vmatpush1.msra.mxu0 %v222
    %250 = vmatprep.subr.mxu0 %v221
    %251 = vmatpush1.msra.mxu0 %v220
    %252 = vmatprep.subr.mxu0 %v219
    %253 = vmatpush1.msra.mxu0 %v218
    %254 = vmatprep.subr.mxu0 %v217
    %255 = vmatpush1.msra.mxu0 %v216
    %256 = vmatprep.subr.mxu0 %v215
    %257 = vmatpush1.msra.mxu0 %v214
    %258 = vmatprep.subr.mxu0 %v213
    %259 = vmatpush1.msra.mxu0 %v212
    %260 = vmatprep.subr.mxu0 %v211
    %261 = vmatpush1.msra.mxu0 %v210
    %262 = vmatprep.subr.mxu0 %v209
    %263 = vmatpush1.msra.mxu0 %v208
    %264 = vmatprep.subr.mxu0 %v207
    %265 = vmatpush1.msra.mxu0 %v206
    %266 = vmatprep.subr.mxu0 %v205
    %267 = vmatpush1.msra.mxu0 %v204
    %268 = vmatprep.subr.mxu0 %v203
    %269 = vmatpush1.msra.mxu0 %v202
    %270 = vmatprep.subr.mxu0 %v201
    %271 = vmatpush1.msra.mxu0 %v200
    %272 = vmatprep.subr.mxu0 %v199
    %273 = vmatpush1.msra.mxu0 %v198
    %274 = vmatprep.subr.mxu0 0.0
    %275 = vmatpush2.msra.mxu0 0.0
    %276 = vmatprep.subr.mxu0 0.0
    %277 = vmatpush2.msra.mxu0 0.0
    %278 = vmatprep.subr.mxu0 0.0
    %279 = vmatpush2.msra.mxu0 0.0
    %280 = vmatprep.subr.mxu0 0.0
    %281 = vmatpush2.msra.mxu0 0.0
    %282 = vmatprep.subr.mxu0 0.0
    %283 = vmatpush2.msra.mxu0 0.0
    %284 = vmatprep.subr.mxu0 0.0
    %285 = vmatpush2.msra.mxu0 0.0
    %286 = vmatprep.subr.mxu0 0.0
    %287 = vmatpush2.msra.mxu0 0.0
    %288 = vmatprep.subr.mxu0 0.0
    %289 = vmatpush2.msra.mxu0 0.0
    %290 = vmatprep.subr.mxu0 0.0
    %291 = vmatpush2.msra.mxu0 0.0
    %292 = vmatprep.subr.mxu0 0.0
    %293 = vmatpush2.msra.mxu0 0.0
    %294 = vmatprep.subr.mxu0 0.0
    %295 = vmatpush2.msra.mxu0 0.0
    %296 = vmatprep.subr.mxu0 0.0
    %297 = vmatpush2.msra.mxu0 0.0
    %298 = vmatprep.subr.mxu0 0.0
    %299 = vmatpush2.msra.mxu0 0.0
    %300 = vmatprep.subr.mxu0 0.0
    %301 = vmatpush2.msra.mxu0 0.0
    %302 = vmatprep.subr.mxu0 0.0
    %303 = vmatpush2.msra.mxu0 0.0
    %304 = vmatprep.subr.mxu0 0.0
    %305 = vmatpush2.msra.mxu0 0.0
    %306 = vmatprep.mubr.f32.mxu0 0.0
    %307 = vmatmul.mubr.f32.gmra.mxu0 %v194
    %v308 = vpop.f32.mrf.mxu0
    %v309 = vadd.f32 %v235, %v308
    %v310 = vpop.f32.mrf.mxu0
    %v311 = vadd.f32 %v239, %v310
    %312 = vmatprep.mubr.f32.mxu0 0.0
    %313 = vmatmul.mubr.f32.gmra.mxu0 %v195
    %v314 = vpop.f32.mrf.mxu0
    %v315 = vadd.f32 %v235, %v314
    %v316 = vpop.f32.mrf.mxu0
    %v317 = vadd.f32 %v239, %v316
    %318 = vmatprep.mubr.f32.mxu0 0.0
    %319 = vmatmul.mubr.f32.gmra.mxu0 %v196
    %v320 = vpop.f32.mrf.mxu0
    %v321 = vadd.f32 %v235, %v320
    %v322 = vpop.f32.mrf.mxu0
    %v323 = vadd.f32 %v239, %v322
    %324 = vmatprep.mubr.f32.mxu0 0.0
    %325 = vmatmul.mubr.f32.gmra.mxu0 %v197
    %v326 = vpop.f32.mrf.mxu0
    %v327 = vadd.f32 %v235, %v326
    %v328 = vpop.f32.mrf.mxu0
    %v329 = vadd.f32 %v239, %v328
    %330 = vdwg.mxu0
    %v331 = vxor.u32 %v309, 2147483648
    %v332 = vxor.u32 %v311, 2147483648
    %v333 = vxor.u32 %v315, 2147483648
    %v334 = vxor.u32 %v317, 2147483648
    %v335 = vxor.u32 %v321, 2147483648
    %v336 = vxor.u32 %v323, 2147483648
    %v337 = vxor.u32 %v327, 2147483648
    %v338 = vxor.u32 %v329, 2147483648
    %v339 = vmul.f32 %v331, 1.442695
    %v340 = vpow.pop %v339
    %v341 = vmul.f32 %v332, 1.442695
    %v342 = vpow.pop %v341
    %v343 = vmul.f32 %v333, 1.442695
    %v344 = vpow.pop %v343
    %v345 = vmul.f32 %v334, 1.442695
    %v346 = vpow.pop %v345
    %v347 = vmul.f32 %v335, 1.442695
    %v348 = vpow.pop %v347
    %v349 = vmul.f32 %v336, 1.442695
    %v350 = vpow.pop %v349
    %v351 = vmul.f32 %v337, 1.442695
    %v352 = vpow.pop %v351
    %v353 = vmul.f32 %v338, 1.442695
    %v354 = vpow.pop %v353
    %v355 = vadd.f32 %v340, 1.0
    %v356 = vadd.f32 %v342, 1.0
    %v357 = vadd.f32 %v344, 1.0
    %v358 = vadd.f32 %v346, 1.0
    %v359 = vadd.f32 %v348, 1.0
    %v360 = vadd.f32 %v350, 1.0
    %v361 = vadd.f32 %v352, 1.0
    %v362 = vadd.f32 %v354, 1.0
    %v363 = vrcp.pop %v355
    %v364 = vmul.f32 1.0, %v363
    %v365 = vrcp.pop %v356
    %v366 = vmul.f32 1.0, %v365
    %v367 = vrcp.pop %v357
    %v368 = vmul.f32 1.0, %v367
    %v369 = vrcp.pop %v358
    %v370 = vmul.f32 1.0, %v369
    %v371 = vrcp.pop %v359
    %v372 = vmul.f32 1.0, %v371
    %v373 = vrcp.pop %v360
    %v374 = vmul.f32 1.0, %v373
    %v375 = vrcp.pop %v361
    %v376 = vmul.f32 1.0, %v375
    %v377 = vrcp.pop %v362
    %v378 = vmul.f32 1.0, %v377
    %379 = vst [vmem:[#allocation8] sm:$0xff] %v364
    %380 = vst [vmem:[#allocation8 + $0x8] sm:$0xff] %v366
    %381 = vst [vmem:[#allocation8 + $0x10] sm:$0xff] %v368
    %382 = vst [vmem:[#allocation8 + $0x18] sm:$0xff] %v370
    %383 = vst [vmem:[#allocation8 + $0x20] sm:$0xff] %v372
    %384 = vst [vmem:[#allocation8 + $0x28] sm:$0xff] %v374
    %385 = vst [vmem:[#allocation8 + $0x30] sm:$0xff] %v376
    %386 = vst [vmem:[#allocation8 + $0x38] sm:$0xff] %v378
    // Predicated region
    $region34: #{tpu_custom_call.1} parent=1 // pred_check
      _
    $region35: #{tpu_custom_call.1} parent=1 // pred_check_branch
      %388 = sbr.rel (0) target = $region37
    $region36: #{tpu_custom_call.1} parent=1 // pred_region
      %s390 = ssub.s32 1024, 1024
      %391 = vsyncadd [#allocation4], %s390
      %s392 = sshll.u32 [#allocation8], 4
      %s393 = int_to_ptr.vmem [resolvable:$true] %s392
      %398 = dma.vmem_to_hbm [thread:$0]  %s393, 1024, %s5, [#allocation4], 256, 256, 16
    $region37: #{tpu_custom_call.1} parent=1 // pred_fallthru
      _
    // Predicated region
    $region38: #{tpu_custom_call.1} parent=1 // pred_check
      _
    $region39: #{tpu_custom_call.1} parent=1 // pred_check_branch
      %400 = sbr.rel (0) target = $region41
    $region40: #{tpu_custom_call.1} parent=1 // pred_region
      %401 = dma.done [#allocation4], 1024
    $region41: #{tpu_custom_call.1} parent=1 // pred_fallthru
      _
    %402 = vsyncpa [#allocation3], 1
    %403 = vsyncpa [#allocation6], 1
    %404 = vsyncpa [#allocation4], 1

</llo_original>
